<compile_context>
chip_gen: v5e
topology: v5e:2x2
jax: 0.10.0
libtpu: 0.0.40
codegen_flags: <defaults>
</compile_context>

<pallas_src>
import functools
import math

import jax
import jax.numpy as jnp
from jax.experimental import pallas as pl
from jax.experimental.pallas import tpu as pltpu


_DOT_DIMS = (((1,), (1,)), ((), ()))  # contract x (tm, tk) with w (tn, tk) on K


# ----------------------------------------------------------------------------
# Kernels
# ----------------------------------------------------------------------------

def _kernel_single(x_ref, w_ref, b_ref, o_ref):
    """Single K step: matmul + bias, write the output tile directly."""
    acc = jax.lax.dot_general(
        x_ref[...], w_ref[...],
        dimension_numbers=_DOT_DIMS,
        preferred_element_type=jnp.float32,
    )
    o_ref[...] = (acc + b_ref[...].astype(jnp.float32)).astype(o_ref.dtype)


def _kernel_multi_f32(x_ref, w_ref, b_ref, o_ref):
    """Multi K step, float32 output: accumulate into the resident output block
    (its block index ignores k), so no scratch and no cast epilogue."""
    @pl.when(pl.program_id(2) == 0)
    def _():
        o_ref[...] = jnp.broadcast_to(b_ref[...].astype(o_ref.dtype), o_ref.shape)

    o_ref[...] += jax.lax.dot_general(
        x_ref[...], w_ref[...],
        dimension_numbers=_DOT_DIMS,
        preferred_element_type=jnp.float32,
    )


def _kernel_multi_acc(x_ref, w_ref, b_ref, o_ref, acc_ref):
    """Multi K step, non-f32 output: f32 scratch accumulator, cast on last step."""
    k = pl.program_id(2)

    @pl.when(k == 0)
    def _():
        acc_ref[...] = jnp.broadcast_to(b_ref[...].astype(jnp.float32), acc_ref.shape)

    acc_ref[...] += jax.lax.dot_general(
        x_ref[...], w_ref[...],
        dimension_numbers=_DOT_DIMS,
        preferred_element_type=jnp.float32,
    )

    @pl.when(k == pl.num_programs(2) - 1)
    def _():
        o_ref[...] = acc_ref[...].astype(o_ref.dtype)


# ----------------------------------------------------------------------------
# Tiling helpers
# ----------------------------------------------------------------------------

def _round_up(v, m):
    return ((v + m - 1) // m) * m


def _cdiv(a, b):
    return (a + b - 1) // b


def _pick_tile(dim, pref, min_tile=256):
    """Pick a tile for one dim.

    dim <= pref -> a single full-extent block (always layout-legal, no waste).
    Otherwise the largest power-of-two tile in [min_tile, pref] whose
    ragged-edge waste is <= ~30%, else the one minimizing wasted extent.
    Never drops below min_tile (=256)."""
    if dim <= pref:
        return dim
    t = pref
    best, best_ext = pref, _round_up(dim, pref)
    while t >= min_tile:
        ext = _round_up(dim, t)
        if ext * 10 <= dim * 13:      # waste <= 30%
            return t
        if ext < best_ext:
            best, best_ext = t, ext
        t //= 2
    return best


@functools.lru_cache(maxsize=None)
def _vmem_capacity_bytes():
    try:
        return int(pltpu.get_tpu_info().vmem_capacity_bytes)
    except Exception:
        return 64 * 1024 * 1024      # conservative: assume the v7x 64 MiB budget


def _tile_config(itemsize):
    vmem = _vmem_capacity_bytes()
    if vmem >= 100 * 1024 * 1024:    # v5e / v6e: 128 MiB physical VMEM
        tm_pref = tn_pref = 1024
        vmem_limit = 96 * 1024 * 1024
    else:                            # v7x: 64 MiB physical VMEM
        tm_pref = tn_pref = 512
        vmem_limit = 40 * 1024 * 1024
    tk_pref = 2048 if itemsize <= 2 else 1024   # bytes halve for 16-bit dtypes
    return tm_pref, tn_pref, tk_pref, vmem_limit


# ----------------------------------------------------------------------------
# Wrapper
# ----------------------------------------------------------------------------

@jax.jit
def affine_forward(x, weight, bias=None):
    """y = x @ weight.T + bias over the last axis of x (n == 1, no fake-quant)."""
    out_features, in_features = weight.shape
    orig_shape = x.shape
    x2d = x.reshape(-1, in_features)            # (M, K)
    M, K = x2d.shape
    N = out_features
    if bias is None:
        bias = jnp.zeros((N,), x.dtype)

    itemsize = jnp.dtype(x.dtype).itemsize
    tm_pref, tn_pref, tk_pref, vmem_limit = _tile_config(itemsize)
    sublane = max(8, 32 // itemsize)            # dtype-aware sublane packing

    tm = _pick_tile(M, tm_pref)
    tn = _pick_tile(N, tn_pref)
    tk = _pick_tile(K, tk_pref)

    # Give the v7x megacore >= 2 blocks on a parallel axis when the grid would
    # otherwise be (1, 1, k); costs at most one extra grid step elsewhere.
    if _cdiv(M, tm) == 1 and _cdiv(N, tn) == 1:
        if N >= 512 and N % 256 == 0:
            tn = N // 2
        elif M >= 512 and M % (2 * sublane) == 0:
            tm = M // 2

    # Only the contraction axis is padded (stale K data would corrupt the
    # reduction); M and N run ragged and Pallas masks the edge blocks, so
    # there is no wrapper-side activation pad nor an out[:M, :N] slice pass.
    Kp = _round_up(K, tk)
    if Kp != K:
        x2d = jnp.pad(x2d, ((0, 0), (0, Kp - K)))
        weight = jnp.pad(weight, ((0, 0), (0, Kp - K)))
    b2d = bias.reshape(1, N)

    grid_m, grid_n, k_steps = _cdiv(M, tm), _cdiv(N, tn), Kp // tk

    cost = pl.CostEstimate(
        flops=2 * M * N * K,
        bytes_accessed=(M * Kp * grid_n + N * Kp * grid_m + M * N + N) * itemsize,
        transcendentals=0,
    )
    out_shape = jax.ShapeDtypeStruct((M, N), x.dtype)
    compiler_params = pltpu.CompilerParams(
        dimension_semantics=(("parallel", "parallel") if k_steps == 1
                             else ("parallel", "parallel", "arbitrary")),
        vmem_limit_bytes=vmem_limit,
    )

    if k_steps == 1:
        # Small-K fast path: 2D grid, no accumulator, no phase gating.
        grid_spec = pltpu.PrefetchScalarGridSpec(
            num_scalar_prefetch=0,
            grid=(grid_m, grid_n),
            in_specs=[
                pl.BlockSpec((tm, tk), lambda i, j: (i, 0)),
                pl.BlockSpec((tn, tk), lambda i, j: (j, 0)),
                pl.BlockSpec((1, tn), lambda i, j: (0, j)),
            ],
            out_specs=pl.BlockSpec((tm, tn), lambda i, j: (i, j)),
        )
        kernel = _kernel_single
    else:
        if x.dtype == jnp.float32:
            kernel, scratch = _kernel_multi_f32, []          # accumulate in o_ref
        else:
            kernel, scratch = _kernel_multi_acc, [pltpu.VMEM((tm, tn), jnp.float32)]
        grid_spec = pltpu.PrefetchScalarGridSpec(
            num_scalar_prefetch=0,
            grid=(grid_m, grid_n, k_steps),
            in_specs=[
                pl.BlockSpec((tm, tk), lambda i, j, k: (i, k)),
                pl.BlockSpec((tn, tk), lambda i, j, k: (j, k)),
                pl.BlockSpec((1, tn), lambda i, j, k: (0, j)),
            ],
            out_specs=pl.BlockSpec((tm, tn), lambda i, j, k: (i, j)),
            scratch_shapes=scratch,
        )

    out = pl.pallas_call(
        kernel,
        out_shape=out_shape,
        grid_spec=grid_spec,
        compiler_params=compiler_params,
        cost_estimate=cost,
    )(x2d, weight, b2d)

    return out.reshape(orig_shape[:-1] + (out_features,))


def init_affine_params(key, in_features, out_features, dtype=jnp.float32):
    """Mirror of Affine.reset_parameters (kaiming_uniform a=sqrt(5) => U(+-1/sqrt(fan_in)))."""
    kw, kb = jax.random.split(key)
    bound = 1.0 / math.sqrt(in_features)
    weight = jax.random.uniform(
        kw, (out_features, in_features), jnp.float32, minval=-bound, maxval=bound
    ).astype(dtype)
    bias = jax.random.uniform(
        kb, (out_features,), jnp.float32, minval=-bound, maxval=bound
    ).astype(dtype)
    return weight, bias


if __name__ == "__main__":
    key = jax.random.PRNGKey(0)
    k1, k2, k3, k4, k5, k6, k7, k8 = jax.random.split(key, 8)

    # Case 1: small, non-aligned shapes (single-K fast path, sub-128 N).
    x = jax.random.normal(k1, (2, 8, 32), jnp.float32)
    w, b = init_affine_params(k2, 32, 64)
    y = jax.block_until_ready(affine_forward(x, w, b))
    y_ref = x @ w.T + b
    assert y.shape == (2, 8, 64)
    assert jnp.allclose(y, y_ref, atol=1e-5, rtol=1e-5)

    # Case 2: K spans multiple K tiles (f32 accumulate-into-output path).
    x2 = jax.random.normal(k3, (2, 64, 2048), jnp.float32)
    w2, b2 = init_affine_params(k4, 2048, 256)
    y2 = jax.block_until_ready(affine_forward(x2, w2, b2))
    y2_ref = (jnp.einsum("bsk,nk->bsn", x2, w2,
                         precision=jax.lax.Precision.HIGHEST) + b2)
    assert y2.shape == (2, 64, 256)
    assert jnp.allclose(y2, y2_ref, atol=1e-2, rtol=1e-2)
    rel_err = jnp.max(jnp.abs(y2 - y2_ref)) / jnp.max(jnp.abs(y2_ref))
    assert float(rel_err) < 2e-2

    # Case 3: bf16, K spans multiple K tiles (f32-scratch accumulator path).
    x3 = jax.random.normal(k5, (2, 8, 4096), jnp.float32).astype(jnp.bfloat16)
    w3, b3 = init_affine_params(k6, 4096, 128, dtype=jnp.bfloat16)
    y3 = jax.block_until_ready(affine_forward(x3, w3, b3))
    y3_ref = (jnp.einsum("bsk,nk->bsn", x3.astype(jnp.float32),
                         w3.astype(jnp.float32),
                         precision=jax.lax.Precision.HIGHEST)
              + b3.astype(jnp.float32))
    assert y3.shape == (2, 8, 128)
    assert jnp.allclose(y3.astype(jnp.float32), y3_ref, atol=5e-2, rtol=5e-2)

    # Case 4: ragged M (M not a tile multiple) -> exercises edge-block masking.
    x4 = jax.random.normal(k7, (1100, 32), jnp.float32)
    w4, b4 = init_affine_params(k8, 32, 64)
    y4 = jax.block_until_ready(affine_forward(x4, w4, b4))
    y4_ref = x4 @ w4.T + b4
    assert y4.shape == (1100, 64)
    assert jnp.allclose(y4, y4_ref, atol=1e-5, rtol=1e-5)

    print("KERNEL_OK")
</pallas_src>

<mosaic_0001>
module attributes {stable_mosaic.version = 11 : i64} {
  func.func @_kernel_single(%arg0: i32, %arg1: i32, %arg2: memref<16x32xf32, #tpu.memory_space<vmem>>, %arg3: memref<64x32xf32, #tpu.memory_space<vmem>>, %arg4: memref<1x64xf32, #tpu.memory_space<vmem>>, %arg5: memref<16x64xf32, #tpu.memory_space<vmem>>) attributes {dimension_semantics = [#tpu.dimension_semantics<parallel>, #tpu.dimension_semantics<parallel>], iteration_bounds = array<i64: 1, 1>, scalar_prefetch = 0 : i64, scratch_operands = 0 : i64, tpu.core_type = #tpu.core_type<tc>, window_params = [{transform_indices = @transform_0, window_bounds = array<i64: 16, 32>}, {transform_indices = @transform_1, window_bounds = array<i64: 64, 32>}, {transform_indices = @transform_2, window_bounds = array<i64: 1, 64>}, {transform_indices = @transform_3, window_bounds = array<i64: 16, 64>}]} {
    %c0 = arith.constant 0 : index
    %c0_0 = arith.constant 0 : index
    %0 = vector.load %arg2[%c0, %c0_0] : memref<16x32xf32, #tpu.memory_space<vmem>>, vector<16x32xf32>
    %c0_1 = arith.constant 0 : index
    %c0_2 = arith.constant 0 : index
    %1 = vector.load %arg3[%c0_1, %c0_2] : memref<64x32xf32, #tpu.memory_space<vmem>>, vector<64x32xf32>
    %cst = arith.constant dense<0.000000e+00> : vector<16x64xf32>
    %2 = tpu.matmul %0, %1, %cst {dimension_numbers = #tpu.dot_dimension_numbers<[1], [1], [0], [0], [0, 0, 1, 0], [], []>} : vector<16x32xf32>, vector<64x32xf32>, vector<16x64xf32> -> vector<16x64xf32>
    %c0_3 = arith.constant 0 : index
    %c0_4 = arith.constant 0 : index
    %3 = vector.load %arg4[%c0_3, %c0_4] : memref<1x64xf32, #tpu.memory_space<vmem>>, vector<1x64xf32>
    %4 = vector.broadcast %3 : vector<1x64xf32> to vector<16x64xf32>
    %5 = arith.addf %2, %4 : vector<16x64xf32>
    %c0_5 = arith.constant 0 : index
    %c0_6 = arith.constant 0 : index
    %6 = vector.load %arg5[%c0_5, %c0_6] : memref<16x64xf32, #tpu.memory_space<vmem>>, vector<16x64xf32>
    tpu.vector_store %arg5[%c0_5, %c0_6], %5 {strides = array<i32>} : memref<16x64xf32, #tpu.memory_space<vmem>>, vector<16x64xf32>,
    return
  }
  func.func @transform_0(%arg0: i32, %arg1: i32) -> (i32, i32) {
    %c0_i32 = arith.constant 0 : i32
    %c0_i32_0 = arith.constant 0 : i32
    return %arg0, %c0_i32 : i32, i32
  }
  func.func @transform_1(%arg0: i32, %arg1: i32) -> (i32, i32) {
    %c0_i32 = arith.constant 0 : i32
    %c0_i32_0 = arith.constant 0 : i32
    return %arg1, %c0_i32 : i32, i32
  }
  func.func @transform_2(%arg0: i32, %arg1: i32) -> (i32, i32) {
    %c0_i32 = arith.constant 0 : i32
    %c0_i32_0 = arith.constant 0 : i32
    return %c0_i32, %arg1 : i32, i32
  }
  func.func @transform_3(%arg0: i32, %arg1: i32) -> (i32, i32) {
    %c0_i32 = arith.constant 0 : i32
    return %arg0, %arg1 : i32, i32
  }
}

</mosaic_0001>

<llo_original>
// kernel: affine_forward.1
$region0: #{affine_forward.1}
  #allocation0 [shape = 'u32[]', space=smem, size = 0x4, offset = 0x4, fixed_abs, tag = 'smem constant byte address 0x4 - core index']
  #allocation1 [shape = 'u32[72,128]{1,0:T(1,128)}', space=vmem, size = 0x9000, scoped, tag = 'internal scratch']
  %s0 = inlined_call_operand.vmem [shape: f32[16,32], index: 0, kind: input, shape index: {}]
  %s1 = inlined_call_operand.vmem [shape: f32[64,32], index: 1, kind: input, shape index: {}]
  %s2 = inlined_call_operand.vmem [shape: f32[1,64], index: 2, kind: input, shape index: {}]
  %s3 = inlined_call_operand.hbm [shape: f32[16,64], index: 3, kind: output, shape index: {}]
  %s4 = sld [smem:[#allocation0]]
  $region22: #{affine_forward.1} parent=0
    _
  %s6 = ssub.s32 1, %s4
  %s7 = scalar_select 0, %s6, %s4
  $region1: #{affine_forward.1} parent=0
    #allocation2 [shape = 'u8[8192]{0}', space=vmem, size = 0x2000, scoped, tag = 'output window, operand 0, single buffered']
    #allocation3 [shape = 's32[1]{0}', space=sflag, size = 0x4, scoped, tag = 'scoped memory for affine_forward.1']
    %8 = vsyncpa [#allocation3], 0
    // Predicated region
    $region2: #{affine_forward.1} parent=1 // pred_check
      _
    $region3: #{affine_forward.1} parent=1 // pred_check_branch
      %10 = sbr.rel (0) target = $region5
    $region4: #{affine_forward.1} parent=1 // pred_region
      _
    $region5: #{affine_forward.1} parent=1 // pred_fallthru
      _
    // Predicated region
    $region6: #{affine_forward.1} parent=1 // pred_check
      _
    $region7: #{affine_forward.1} parent=1 // pred_check_branch
      %12 = sbr.rel (0) target = $region9
    $region8: #{affine_forward.1} parent=1 // pred_region
      _
    $region9: #{affine_forward.1} parent=1 // pred_fallthru
      _
    // Predicated region
    $region10: #{affine_forward.1} parent=1 // pred_check
      _
    $region11: #{affine_forward.1} parent=1 // pred_check_branch
      %14 = sbr.rel (0) target = $region13
    $region12: #{affine_forward.1} parent=1 // pred_region
      _
    $region13: #{affine_forward.1} parent=1 // pred_fallthru
      _
    %v15 = vld [vmem:[%s0] sm:$0xff]
    %v16 = vld [vmem:[%s0 + $0x8] sm:$0xff]
    %v17 = vld [vmem:[%s1] sm:$0xff]
    %v18 = vld [vmem:[%s1 + $0x8] sm:$0xff]
    %v19 = vld [vmem:[%s1 + $0x10] sm:$0xff]
    %v20 = vld [vmem:[%s1 + $0x18] sm:$0xff]
    %v21 = vld [vmem:[%s1 + $0x20] sm:$0xff]
    %v22 = vld [vmem:[%s1 + $0x28] sm:$0xff]
    %v23 = vld [vmem:[%s1 + $0x30] sm:$0xff]
    %v24 = vld [vmem:[%s1 + $0x38] sm:$0xff]
    %v25 = vld [vmem:[%s2] sm:$0x1]
    %v27 = vperm.slane %v25, 0
    %vm29 = vcmask 261120
    %v31 = vsel %vm29, %v15, 0
    %v34 = vsel %vm29, %v16, 0
    %v37 = vsel %vm29, %v17, 0
    %v40 = vsel %vm29, %v18, 0
    %v43 = vsel %vm29, %v19, 0
    %v46 = vsel %vm29, %v20, 0
    %v49 = vsel %vm29, %v21, 0
    %v52 = vsel %vm29, %v22, 0
    %v55 = vsel %vm29, %v23, 0
    %v58 = vsel %vm29, %v24, 0
    %60 = vmatpush.xpose.msra.mxu0 0.0
    %61 = vmatpush.xpose.msra.mxu0 0.0
    %62 = vmatpush.xpose.msra.mxu0 0.0
    %63 = vmatpush.xpose.msra.mxu0 0.0
    %64 = vmatpush.xpose.msra.mxu0 0.0
    %65 = vmatpush.xpose.msra.mxu0 0.0
    %66 = vmatpush.xpose.msra.mxu0 0.0
    %67 = vmatpush.xpose.msra.mxu0 0.0
    %68 = vmatpush.xpose.msra.mxu0 %v58
    %69 = vmatpush.xpose.msra.mxu0 %v55
    %70 = vmatpush.xpose.msra.mxu0 %v52
    %71 = vmatpush.xpose.msra.mxu0 %v49
    %72 = vmatpush.xpose.msra.mxu0 %v46
    %73 = vmatpush.xpose.msra.mxu0 %v43
    %74 = vmatpush.xpose.msra.mxu0 %v40
    %75 = vmatpush.xpose.msra.mxu0 %v37
    %76 = vmatmul.f32.gmra.mxu0 %v31
    %v77 = vpop.f32.mrf.mxu0
    %v78 = vadd.f32 %v27, %v77
    %79 = vmatmul.f32.gmra.mxu0 %v34
    %v80 = vpop.f32.mrf.mxu0
    %v81 = vadd.f32 %v27, %v80
    %82 = vdwg.mxu0
    %vm83 = vcmask 523264
    %84 = vst.msk [vmem:[#allocation2] sm:$0xff] %vm83, %v78
    %85 = vst.msk [vmem:[#allocation2 + $0x8] sm:$0xff] %vm83, %v81
    // Predicated region
    $region14: #{affine_forward.1} parent=1 // pred_check
      _
    $region15: #{affine_forward.1} parent=1 // pred_check_branch
      %87 = sbr.rel (0) target = $region17
    $region16: #{affine_forward.1} parent=1 // pred_region
      %89 = vsyncadd [#allocation3], 0
      %s90 = sshll.u32 [#allocation2], 4
      %s91 = int_to_ptr.vmem [resolvable:$true] %s90
      %s92 = sshll.u32 %s3, 4
      %s93 = int_to_ptr.hbm [resolvable:$true] %s92
      %98 = dma.vmem_to_hbm [thread:$0]  %s91, 256, %s93, [#allocation3], 128, 128, 8
    $region17: #{affine_forward.1} parent=1 // pred_fallthru
      _
    // Predicated region
    $region18: #{affine_forward.1} parent=1 // pred_check
      _
    $region19: #{affine_forward.1} parent=1 // pred_check_branch
      %100 = sbr.rel (0) target = $region21
    $region20: #{affine_forward.1} parent=1 // pred_region
      %102 = dma.done [#allocation3], 256
    $region21: #{affine_forward.1} parent=1 // pred_fallthru
      _
    %103 = vsyncpa [#allocation3], 1

</llo_original>
